<compile_context>
chip_gen: v5e
topology: v5e:2x2
jax: 0.10.0
libtpu: 0.0.40
codegen_flags: <defaults>
</compile_context>

<pallas_src>
import jax
import jax.numpy as jnp
import numpy as np
from jax import lax
from jax.experimental import pallas as pl
from jax.experimental.pallas import tpu as pltpu


def _softmax_axis0(x):
    # Exact softmax: the approx EUP reciprocal bought no wall-clock here and
    # cost ~3 digits of accuracy through the downstream matmuls.
    m = jnp.max(x, axis=0, keepdims=True)
    e = jnp.exp(x - m)
    return e / jnp.sum(e, axis=0, keepdims=True)


def static_transformer_kernel(total_ref,            # (B, CT, N*L)  lane-dense
                              center_ref,           # (CT, B*L)     batch-in-lanes
                              wfa_ref, bfa_ref,     # (N*L, CT), (N*L, 1)
                              wkqv_ref, bkqv_ref,   # (2*CT, CT), (2*CT, 1)
                              wlf_ref, blf_ref,     # (CT, CT), (CT, 1)
                              out_ref,              # (CT, B*L)
                              inter_sc,             # VMEM (CT, B*L) f32
                              att_sc):              # VMEM (CT, B*L) f32
    B, CT, NL = total_ref.shape
    BL = center_ref.shape[1]
    L = BL // B
    HC = CT // 2

    center_all = center_ref[...].astype(jnp.float32)          # (CT, B*L)

    # frame_att_conv + softmax: ONE lane-batched MXU push for the whole batch.
    coef_all = jnp.dot(wfa_ref[...], center_all,
                       preferred_element_type=jnp.float32) + bfa_ref[...]
    coef_all = _softmax_axis0(coef_all)                        # (N*L, B*L)

    # inter_fusion = center + total_info @ coef : one K = N*L contraction per
    # batch element (B is tiny -> static unroll; for large B switch to a
    # fori_loop / fully lane-batched formulation to bound live ranges).
    for b in range(B):
        sl = slice(b * L, (b + 1) * L)
        inter_sc[:, sl] = jnp.dot(total_ref[b], coef_all[:, sl],
                                  preferred_element_type=jnp.float32)
    inter_all = center_all + inter_sc[...]                     # (CT, B*L)

    # Fused K/Q/V 1x1 convs: ONE lane-batched MXU push, then static slices.
    kqv_proj = jnp.dot(wkqv_ref[...], inter_all,
                       preferred_element_type=jnp.float32) + bkqv_ref[...]
    k_all = kqv_proj[:HC]          # (CT//2, B*L)
    q_all = kqv_proj[HC:CT]        # (CT//2, B*L)
    v_all = kqv_proj[CT:]          # (CT,    B*L)

    # Per-batch (L, L) attention (the only part that cannot share lanes).
    for b in range(B):
        sl = slice(b * L, (b + 1) * L)
        kq = lax.dot_general(k_all[:, sl], q_all[:, sl],
                             dimension_numbers=(((0,), (0,)), ((), ())),
                             preferred_element_type=jnp.float32)   # (L, L)
        kq = _softmax_axis0(kq)
        att_sc[:, sl] = jnp.dot(v_all[:, sl], kq,
                                preferred_element_type=jnp.float32)
    kqv_all = att_sc[...] + center_all                         # (CT, B*L)

    # last_fusion: ONE lane-batched MXU push + a single (CT, B*L) slab store.
    out = center_all + jnp.dot(wlf_ref[...], kqv_all,
                               preferred_element_type=jnp.float32) + blf_ref[...]
    out_ref[...] = out.astype(out_ref.dtype)


def static_transformer(tokens, params):
    B, N, CT, L = tokens.shape
    wfa, bfa, wk, bk, wq, bq, wv, bv, wlf, blf = params
    NL = N * L

    # Fuse K/Q/V conv weights/biases outside the kernel (one MXU push inside).
    wkqv = jnp.concatenate([wk, wq, wv], axis=0)   # (2*CT, CT)
    bkqv = jnp.concatenate([bk, bq, bv], axis=0)   # (2*CT, 1)

    # Wrapper-side (free) re-layout to lane-dense operands.
    total_info = jnp.transpose(tokens, (0, 2, 1, 3)).reshape(B, CT, NL)
    center = jnp.transpose(tokens[:, N // 2], (1, 0, 2)).reshape(CT, B * L)

    grid_spec = pltpu.PrefetchScalarGridSpec(
        num_scalar_prefetch=0,
        # Single grid step: v5e/v6e are 1 TC (extra steps = pure ~0.35us/step
        # overhead) and the v7x 2-core split is not worth it at this size.
        grid=(1,),
        in_specs=[
            pl.BlockSpec(total_info.shape, lambda g: (0, 0, 0)),
            pl.BlockSpec(center.shape, lambda g: (0, 0)),
            pl.BlockSpec(wfa.shape, lambda g: (0, 0)),
            pl.BlockSpec(bfa.shape, lambda g: (0, 0)),
            pl.BlockSpec(wkqv.shape, lambda g: (0, 0)),
            pl.BlockSpec(bkqv.shape, lambda g: (0, 0)),
            pl.BlockSpec(wlf.shape, lambda g: (0, 0)),
            pl.BlockSpec(blf.shape, lambda g: (0, 0)),
        ],
        out_specs=pl.BlockSpec((CT, B * L), lambda g: (0, 0)),
        scratch_shapes=[pltpu.VMEM((CT, B * L), jnp.float32),
                        pltpu.VMEM((CT, B * L), jnp.float32)],
    )

    out_slab = pl.pallas_call(
        static_transformer_kernel,
        out_shape=jax.ShapeDtypeStruct((CT, B * L), tokens.dtype),
        grid_spec=grid_spec,
        compiler_params=pltpu.CompilerParams(
            dimension_semantics=("arbitrary",)),
    )(total_info, center, wfa, bfa, wkqv, bkqv, wlf, blf)

    # Undo the batch-in-lane layout: (CT, B*L) -> (B, CT, L).
    return jnp.transpose(out_slab.reshape(CT, B, L), (1, 0, 2))


def reference(tokens, params):
    """Pure-JAX reference mirroring the PyTorch forward pass."""
    wfa, bfa, wk, bk, wq, bq, wv, bv, wlf, blf = params
    B, N, CT, L = tokens.shape
    center = tokens[:, N // 2, :, :]
    total = jnp.transpose(tokens, (0, 2, 1, 3)).reshape(B, CT, N * L)

    coef = jnp.einsum('oc,bcl->bol', wfa, center) + bfa[None]
    coef = jax.nn.softmax(coef, axis=1)
    inter = center + jnp.einsum('bcn,bnl->bcl', total, coef)
    k = jnp.einsum('oc,bcl->bol', wk, inter) + bk[None]
    q = jnp.einsum('oc,bcl->bol', wq, inter) + bq[None]
    v = jnp.einsum('oc,bcl->bol', wv, inter) + bv[None]
    kq = jnp.einsum('bcm,bcl->bml', k, q)
    kq = jax.nn.softmax(kq, axis=1)
    kqv = jnp.einsum('bcm,bml->bcl', v, kq) + center
    return center + jnp.einsum('oc,bcl->bol', wlf, kqv) + blf[None]


def init_params(key, CT, total_tokens, dtype=jnp.float32):
    ks = jax.random.split(key, 10)
    s = 0.1
    wfa = s * jax.random.normal(ks[0], (total_tokens, CT), dtype)
    bfa = s * jax.random.normal(ks[1], (total_tokens, 1), dtype)
    wk = s * jax.random.normal(ks[2], (CT // 2, CT), dtype)
    bk = s * jax.random.normal(ks[3], (CT // 2, 1), dtype)
    wq = s * jax.random.normal(ks[4], (CT // 2, CT), dtype)
    bq = s * jax.random.normal(ks[5], (CT // 2, 1), dtype)
    wv = s * jax.random.normal(ks[6], (CT, CT), dtype)
    bv = s * jax.random.normal(ks[7], (CT, 1), dtype)
    wlf = s * jax.random.normal(ks[8], (CT, CT), dtype)
    blf = s * jax.random.normal(ks[9], (CT, 1), dtype)
    return (wfa, bfa, wk, bk, wq, bq, wv, bv, wlf, blf)


if __name__ == "__main__":
    B, N, CT, L = 2, 8, 16, 16          # total_tokens must equal N*L
    key = jax.random.PRNGKey(0)
    k_tok, k_par = jax.random.split(key)
    tokens = jax.random.normal(k_tok, (B, N, CT, L), jnp.float32)
    params = init_params(k_par, CT, N * L)

    out = static_transformer(tokens, params)
    out = jax.block_until_ready(out)

    ref = jax.block_until_ready(reference(tokens, params))
    # Exact-division softmax -> tight tolerance.
    np.testing.assert_allclose(np.asarray(out), np.asarray(ref),
                               rtol=1e-5, atol=1e-5)
    print("KERNEL_OK")
</pallas_src>

<mosaic_0001>
module attributes {stable_mosaic.version = 11 : i64} {
  func.func @static_transformer_kernel(%arg0: i32, %arg1: memref<2x16x128xf32, #tpu.memory_space<vmem>>, %arg2: memref<16x32xf32, #tpu.memory_space<vmem>>, %arg3: memref<128x16xf32, #tpu.memory_space<vmem>>, %arg4: memref<128x1xf32, #tpu.memory_space<vmem>>, %arg5: memref<32x16xf32, #tpu.memory_space<vmem>>, %arg6: memref<32x1xf32, #tpu.memory_space<vmem>>, %arg7: memref<16x16xf32, #tpu.memory_space<vmem>>, %arg8: memref<16x1xf32, #tpu.memory_space<vmem>>, %arg9: memref<16x32xf32, #tpu.memory_space<vmem>>, %arg10: memref<16x32xf32, #tpu.memory_space<vmem>>, %arg11: memref<16x32xf32, #tpu.memory_space<vmem>>) attributes {dimension_semantics = [#tpu.dimension_semantics<arbitrary>], iteration_bounds = array<i64: 1>, scalar_prefetch = 0 : i64, scratch_operands = 2 : i64, tpu.core_type = #tpu.core_type<tc>, window_params = [{pipeline_mode = #tpu.pipeline_mode<synchronous>, transform_indices = @transform_0, window_bounds = array<i64: 2, 16, 128>}, {pipeline_mode = #tpu.pipeline_mode<synchronous>, transform_indices = @transform_1, window_bounds = array<i64: 16, 32>}, {pipeline_mode = #tpu.pipeline_mode<synchronous>, transform_indices = @transform_2, window_bounds = array<i64: 128, 16>}, {pipeline_mode = #tpu.pipeline_mode<synchronous>, transform_indices = @transform_3, window_bounds = array<i64: 128, 1>}, {pipeline_mode = #tpu.pipeline_mode<synchronous>, transform_indices = @transform_4, window_bounds = array<i64: 32, 16>}, {pipeline_mode = #tpu.pipeline_mode<synchronous>, transform_indices = @transform_5, window_bounds = array<i64: 32, 1>}, {pipeline_mode = #tpu.pipeline_mode<synchronous>, transform_indices = @transform_6, window_bounds = array<i64: 16, 16>}, {pipeline_mode = #tpu.pipeline_mode<synchronous>, transform_indices = @transform_7, window_bounds = array<i64: 16, 1>}, {pipeline_mode = #tpu.pipeline_mode<synchronous>, transform_indices = @transform_8, window_bounds = array<i64: 16, 32>}]} {
    %c0 = arith.constant 0 : index
    %c0_0 = arith.constant 0 : index
    %0 = vector.load %arg2[%c0, %c0_0] : memref<16x32xf32, #tpu.memory_space<vmem>>, vector<16x32xf32>
    %c0_1 = arith.constant 0 : index
    %c0_2 = arith.constant 0 : index
    %1 = vector.load %arg3[%c0_1, %c0_2] : memref<128x16xf32, #tpu.memory_space<vmem>>, vector<128x16xf32>
    %cst = arith.constant dense<0.000000e+00> : vector<128x32xf32>
    %2 = tpu.matmul %1, %0, %cst {dimension_numbers = #tpu.dot_dimension_numbers<[1], [0], [0], [1], [0, 0, 1, 1], [], []>} : vector<128x16xf32>, vector<16x32xf32>, vector<128x32xf32> -> vector<128x32xf32>
    %c0_3 = arith.constant 0 : index
    %c0_4 = arith.constant 0 : index
    %3 = vector.load %arg4[%c0_3, %c0_4] : memref<128x1xf32, #tpu.memory_space<vmem>>, vector<128x1xf32>
    %4 = vector.broadcast %3 : vector<128x1xf32> to vector<128x32xf32>
    %5 = arith.addf %2, %4 : vector<128x32xf32>
    %cst_5 = arith.constant dense<0xFF800000> : vector<32xf32>
    %6 = vector.multi_reduction <maximumf>, %5, %cst_5 [0] : vector<128x32xf32> to vector<32xf32>
    %7 = vector.shape_cast %6 : vector<32xf32> to vector<1x32xf32>
    %8 = vector.broadcast %7 : vector<1x32xf32> to vector<128x32xf32>
    %9 = arith.subf %5, %8 : vector<128x32xf32>
    %10 = math.exp %9 : vector<128x32xf32>
    %cst_6 = arith.constant dense<0.000000e+00> : vector<32xf32>
    %11 = vector.multi_reduction <add>, %10, %cst_6 [0] : vector<128x32xf32> to vector<32xf32>
    %12 = vector.shape_cast %11 : vector<32xf32> to vector<1x32xf32>
    %13 = vector.broadcast %12 : vector<1x32xf32> to vector<128x32xf32>
    %14 = arith.divf %10, %13 : vector<128x32xf32>
    %c0_7 = arith.constant 0 : index
    %c0_8 = arith.constant 0 : index
    %c0_9 = arith.constant 0 : index
    %15 = vector.load %arg1[%c0_7, %c0_8, %c0_9] : memref<2x16x128xf32, #tpu.memory_space<vmem>>, vector<1x16x128xf32>
    %16 = vector.shape_cast %15 : vector<1x16x128xf32> to vector<16x128xf32>
    %17 = vector.extract_strided_slice %14 {offsets = [0, 0], sizes = [128, 16], strides = [1, 1]} : vector<128x32xf32> to vector<128x16xf32>
    %cst_10 = arith.constant dense<0.000000e+00> : vector<16x16xf32>
    %18 = tpu.matmul %16, %17, %cst_10 {dimension_numbers = #tpu.dot_dimension_numbers<[1], [0], [0], [1], [0, 0, 1, 1], [], []>} : vector<16x128xf32>, vector<128x16xf32>, vector<16x16xf32> -> vector<16x16xf32>
    %c0_11 = arith.constant 0 : index
    %c0_12 = arith.constant 0 : index
    %19 = vector.load %arg10[%c0_11, %c0_12] : memref<16x32xf32, #tpu.memory_space<vmem>>, vector<16x16xf32>
    tpu.vector_store %arg10[%c0_11, %c0_12], %18 {strides = array<i32>} : memref<16x32xf32, #tpu.memory_space<vmem>>, vector<16x16xf32>,
    %c1 = arith.constant 1 : index
    %c0_13 = arith.constant 0 : index
    %c0_14 = arith.constant 0 : index
    %20 = vector.load %arg1[%c1, %c0_13, %c0_14] : memref<2x16x128xf32, #tpu.memory_space<vmem>>, vector<1x16x128xf32>
    %21 = vector.shape_cast %20 : vector<1x16x128xf32> to vector<16x128xf32>
    %22 = vector.extract_strided_slice %14 {offsets = [0, 16], sizes = [128, 16], strides = [1, 1]} : vector<128x32xf32> to vector<128x16xf32>
    %cst_15 = arith.constant dense<0.000000e+00> : vector<16x16xf32>
    %23 = tpu.matmul %21, %22, %cst_15 {dimension_numbers = #tpu.dot_dimension_numbers<[1], [0], [0], [1], [0, 0, 1, 1], [], []>} : vector<16x128xf32>, vector<128x16xf32>, vector<16x16xf32> -> vector<16x16xf32>
    %c0_16 = arith.constant 0 : index
    %c16 = arith.constant 16 : index
    %24 = vector.load %arg10[%c0_16, %c16] : memref<16x32xf32, #tpu.memory_space<vmem>>, vector<16x16xf32>
    tpu.vector_store %arg10[%c0_16, %c16], %23 {strides = array<i32>} : memref<16x32xf32, #tpu.memory_space<vmem>>, vector<16x16xf32>,
    %c0_17 = arith.constant 0 : index
    %c0_18 = arith.constant 0 : index
    %25 = vector.load %arg10[%c0_17, %c0_18] : memref<16x32xf32, #tpu.memory_space<vmem>>, vector<16x32xf32>
    %26 = arith.addf %0, %25 : vector<16x32xf32>
    %c0_19 = arith.constant 0 : index
    %c0_20 = arith.constant 0 : index
    %27 = vector.load %arg5[%c0_19, %c0_20] : memref<32x16xf32, #tpu.memory_space<vmem>>, vector<32x16xf32>
    %cst_21 = arith.constant dense<0.000000e+00> : vector<32x32xf32>
    %28 = tpu.matmul %27, %26, %cst_21 {dimension_numbers = #tpu.dot_dimension_numbers<[1], [0], [0], [1], [0, 0, 1, 1], [], []>} : vector<32x16xf32>, vector<16x32xf32>, vector<32x32xf32> -> vector<32x32xf32>
    %c0_22 = arith.constant 0 : index
    %c0_23 = arith.constant 0 : index
    %29 = vector.load %arg6[%c0_22, %c0_23] : memref<32x1xf32, #tpu.memory_space<vmem>>, vector<32x1xf32>
    %30 = vector.broadcast %29 : vector<32x1xf32> to vector<32x32xf32>
    %31 = arith.addf %28, %30 : vector<32x32xf32>
    %32 = vector.extract_strided_slice %31 {offsets = [0, 0], sizes = [8, 32], strides = [1, 1]} : vector<32x32xf32> to vector<8x32xf32>
    %33 = vector.extract_strided_slice %31 {offsets = [8, 0], sizes = [8, 32], strides = [1, 1]} : vector<32x32xf32> to vector<8x32xf32>
    %34 = vector.extract_strided_slice %31 {offsets = [16, 0], sizes = [16, 32], strides = [1, 1]} : vector<32x32xf32> to vector<16x32xf32>
    %35 = vector.extract_strided_slice %32 {offsets = [0, 0], sizes = [8, 16], strides = [1, 1]} : vector<8x32xf32> to vector<8x16xf32>
    %36 = vector.extract_strided_slice %33 {offsets = [0, 0], sizes = [8, 16], strides = [1, 1]} : vector<8x32xf32> to vector<8x16xf32>
    %cst_24 = arith.constant dense<0.000000e+00> : vector<16x16xf32>
    %37 = tpu.matmul %35, %36, %cst_24 {dimension_numbers = #tpu.dot_dimension_numbers<[0], [0], [1], [1], [0, 1, 1, 1], [], []>} : vector<8x16xf32>, vector<8x16xf32>, vector<16x16xf32> -> vector<16x16xf32>
    %cst_25 = arith.constant dense<0xFF800000> : vector<16xf32>
    %38 = vector.multi_reduction <maximumf>, %37, %cst_25 [0] : vector<16x16xf32> to vector<16xf32>
    %39 = vector.shape_cast %38 : vector<16xf32> to vector<1x16xf32>
    %40 = vector.broadcast %39 : vector<1x16xf32> to vector<16x16xf32>
    %41 = arith.subf %37, %40 : vector<16x16xf32>
    %42 = math.exp %41 : vector<16x16xf32>
    %cst_26 = arith.constant dense<0.000000e+00> : vector<16xf32>
    %43 = vector.multi_reduction <add>, %42, %cst_26 [0] : vector<16x16xf32> to vector<16xf32>
    %44 = vector.shape_cast %43 : vector<16xf32> to vector<1x16xf32>
    %45 = vector.broadcast %44 : vector<1x16xf32> to vector<16x16xf32>
    %46 = arith.divf %42, %45 : vector<16x16xf32>
    %47 = vector.extract_strided_slice %34 {offsets = [0, 0], sizes = [16, 16], strides = [1, 1]} : vector<16x32xf32> to vector<16x16xf32>
    %cst_27 = arith.constant dense<0.000000e+00> : vector<16x16xf32>
    %48 = tpu.matmul %47, %46, %cst_27 {dimension_numbers = #tpu.dot_dimension_numbers<[1], [0], [0], [1], [0, 0, 1, 1], [], []>} : vector<16x16xf32>, vector<16x16xf32>, vector<16x16xf32> -> vector<16x16xf32>
    %c0_28 = arith.constant 0 : index
    %c0_29 = arith.constant 0 : index
    %49 = vector.load %arg11[%c0_28, %c0_29] : memref<16x32xf32, #tpu.memory_space<vmem>>, vector<16x16xf32>
    tpu.vector_store %arg11[%c0_28, %c0_29], %48 {strides = array<i32>} : memref<16x32xf32, #tpu.memory_space<vmem>>, vector<16x16xf32>,
    %50 = vector.extract_strided_slice %32 {offsets = [0, 16], sizes = [8, 16], strides = [1, 1]} : vector<8x32xf32> to vector<8x16xf32>
    %51 = vector.extract_strided_slice %33 {offsets = [0, 16], sizes = [8, 16], strides = [1, 1]} : vector<8x32xf32> to vector<8x16xf32>
    %cst_30 = arith.constant dense<0.000000e+00> : vector<16x16xf32>
    %52 = tpu.matmul %50, %51, %cst_30 {dimension_numbers = #tpu.dot_dimension_numbers<[0], [0], [1], [1], [0, 1, 1, 1], [], []>} : vector<8x16xf32>, vector<8x16xf32>, vector<16x16xf32> -> vector<16x16xf32>
    %cst_31 = arith.constant dense<0xFF800000> : vector<16xf32>
    %53 = vector.multi_reduction <maximumf>, %52, %cst_31 [0] : vector<16x16xf32> to vector<16xf32>
    %54 = vector.shape_cast %53 : vector<16xf32> to vector<1x16xf32>
    %55 = vector.broadcast %54 : vector<1x16xf32> to vector<16x16xf32>
    %56 = arith.subf %52, %55 : vector<16x16xf32>
    %57 = math.exp %56 : vector<16x16xf32>
    %cst_32 = arith.constant dense<0.000000e+00> : vector<16xf32>
    %58 = vector.multi_reduction <add>, %57, %cst_32 [0] : vector<16x16xf32> to vector<16xf32>
    %59 = vector.shape_cast %58 : vector<16xf32> to vector<1x16xf32>
    %60 = vector.broadcast %59 : vector<1x16xf32> to vector<16x16xf32>
    %61 = arith.divf %57, %60 : vector<16x16xf32>
    %62 = vector.extract_strided_slice %34 {offsets = [0, 16], sizes = [16, 16], strides = [1, 1]} : vector<16x32xf32> to vector<16x16xf32>
    %cst_33 = arith.constant dense<0.000000e+00> : vector<16x16xf32>
    %63 = tpu.matmul %62, %61, %cst_33 {dimension_numbers = #tpu.dot_dimension_numbers<[1], [0], [0], [1], [0, 0, 1, 1], [], []>} : vector<16x16xf32>, vector<16x16xf32>, vector<16x16xf32> -> vector<16x16xf32>
    %c0_34 = arith.constant 0 : index
    %c16_35 = arith.constant 16 : index
    %64 = vector.load %arg11[%c0_34, %c16_35] : memref<16x32xf32, #tpu.memory_space<vmem>>, vector<16x16xf32>
    tpu.vector_store %arg11[%c0_34, %c16_35], %63 {strides = array<i32>} : memref<16x32xf32, #tpu.memory_space<vmem>>, vector<16x16xf32>,
    %c0_36 = arith.constant 0 : index
    %c0_37 = arith.constant 0 : index
    %65 = vector.load %arg11[%c0_36, %c0_37] : memref<16x32xf32, #tpu.memory_space<vmem>>, vector<16x32xf32>
    %66 = arith.addf %65, %0 : vector<16x32xf32>
    %c0_38 = arith.constant 0 : index
    %c0_39 = arith.constant 0 : index
    %67 = vector.load %arg7[%c0_38, %c0_39] : memref<16x16xf32, #tpu.memory_space<vmem>>, vector<16x16xf32>
    %cst_40 = arith.constant dense<0.000000e+00> : vector<16x32xf32>
    %68 = tpu.matmul %67, %66, %cst_40 {dimension_numbers = #tpu.dot_dimension_numbers<[1], [0], [0], [1], [0, 0, 1, 1], [], []>} : vector<16x16xf32>, vector<16x32xf32>, vector<16x32xf32> -> vector<16x32xf32>
    %69 = arith.addf %0, %68 : vector<16x32xf32>
    %c0_41 = arith.constant 0 : index
    %c0_42 = arith.constant 0 : index
    %70 = vector.load %arg8[%c0_41, %c0_42] : memref<16x1xf32, #tpu.memory_space<vmem>>, vector<16x1xf32>
    %71 = vector.broadcast %70 : vector<16x1xf32> to vector<16x32xf32>
    %72 = arith.addf %69, %71 : vector<16x32xf32>
    %c0_43 = arith.constant 0 : index
    %c0_44 = arith.constant 0 : index
    %73 = vector.load %arg9[%c0_43, %c0_44] : memref<16x32xf32, #tpu.memory_space<vmem>>, vector<16x32xf32>
    tpu.vector_store %arg9[%c0_43, %c0_44], %72 {strides = array<i32>} : memref<16x32xf32, #tpu.memory_space<vmem>>, vector<16x32xf32>,
    return
  }
  func.func @transform_0(%arg0: i32) -> (i32, i32, i32) {
    %c0_i32 = arith.constant 0 : i32
    %c0_i32_0 = arith.constant 0 : i32
    %c0_i32_1 = arith.constant 0 : i32
    %c0_i32_2 = arith.constant 0 : i32
    return %c0_i32, %c0_i32_0, %c0_i32_1 : i32, i32, i32
  }
  func.func @transform_1(%arg0: i32) -> (i32, i32) {
    %c0_i32 = arith.constant 0 : i32
    %c0_i32_0 = arith.constant 0 : i32
    %c0_i32_1 = arith.constant 0 : i32
    return %c0_i32, %c0_i32_0 : i32, i32
  }
  func.func @transform_2(%arg0: i32) -> (i32, i32) {
    %c0_i32 = arith.constant 0 : i32
    %c0_i32_0 = arith.constant 0 : i32
    %c0_i32_1 = arith.constant 0 : i32
    return %c0_i32, %c0_i32_0 : i32, i32
  }
  func.func @transform_3(%arg0: i32) -> (i32, i32) {
    %c0_i32 = arith.constant 0 : i32
    %c0_i32_0 = arith.constant 0 : i32
    %c0_i32_1 = arith.constant 0 : i32
    return %c0_i32, %c0_i32_0 : i32, i32
  }
  func.func @transform_4(%arg0: i32) -> (i32, i32) {
    %c0_i32 = arith.constant 0 : i32
    %c0_i32_0 = arith.constant 0 : i32
    %c0_i32_1 = arith.constant 0 : i32
    return %c0_i32, %c0_i32_0 : i32, i32
  }
  func.func @transform_5(%arg0: i32) -> (i32, i32) {
    %c0_i32 = arith.constant 0 : i32
    %c0_i32_0 = arith.constant 0 : i32
    %c0_i32_1 = arith.constant 0 : i32
    return %c0_i32, %c0_i32_0 : i32, i32
  }
  func.func @transform_6(%arg0: i32) -> (i32, i32) {
    %c0_i32 = arith.constant 0 : i32
    %c0_i32_0 = arith.constant 0 : i32
    %c0_i32_1 = arith.constant 0 : i32
    return %c0_i32, %c0_i32_0 : i32, i32
  }
  func.func @transform_7(%arg0: i32) -> (i32, i32) {
    %c0_i32 = arith.constant 0 : i32
    %c0_i32_0 = arith.constant 0 : i32
    %c0_i32_1 = arith.constant 0 : i32
    return %c0_i32, %c0_i32_0 : i32, i32
  }
  func.func @transform_8(%arg0: i32) -> (i32, i32) {
    %c0_i32 = arith.constant 0 : i32
    %c0_i32_0 = arith.constant 0 : i32
    %c0_i32_1 = arith.constant 0 : i32
    return %c0_i32, %c0_i32_0 : i32, i32
  }
}

</mosaic_0001>

<llo_original>
// kernel: tpu_custom_call.1
$region0: #{tpu_custom_call.1}
  #allocation0 [shape = 'u32[]', space=smem, size = 0x4, offset = 0x4, fixed_abs, tag = 'smem constant byte address 0x4 - core index']
  #allocation1 [shape = 'u32[72,128]{1,0:T(1,128)}', space=vmem, size = 0x9000, scoped, tag = 'internal scratch']
  #allocation2 [shape = 'f32[16,32]{1,0:T(8,128)}', space=vmem, size = 0x2000, scoped, tag = 'scratch operand']
  #allocation3 [shape = 'f32[16,32]{1,0:T(8,128)}', space=vmem, size = 0x2000, scoped, tag = 'scratch operand']
  %s0 = inlined_call_operand.vmem [shape: f32[2,16,128], index: 0, kind: input, shape index: {}]
  %s1 = inlined_call_operand.vmem [shape: f32[16,32], index: 1, kind: input, shape index: {}]
  %s2 = inlined_call_operand.vmem [shape: f32[128,16], index: 2, kind: input, shape index: {}]
  %s3 = inlined_call_operand.vmem [shape: f32[128,1], index: 3, kind: input, shape index: {}]
  %s4 = inlined_call_operand.vmem [shape: f32[32,16], index: 4, kind: input, shape index: {}]
  %s5 = inlined_call_operand.vmem [shape: f32[32,1], index: 5, kind: input, shape index: {}]
  %s6 = inlined_call_operand.vmem [shape: f32[16,16], index: 6, kind: input, shape index: {}]
  %s7 = inlined_call_operand.vmem [shape: f32[16,1], index: 7, kind: input, shape index: {}]
  %s8 = inlined_call_operand.hbm [shape: f32[16,32], index: 8, kind: output, shape index: {}]
  %s9 = sld [smem:[#allocation0]]
  $region42: #{tpu_custom_call.1} parent=0
    _
  %s11 = ssub.s32 1, %s9
  %s12 = scalar_select 0, %s11, %s9
  $region1: #{tpu_custom_call.1} parent=0
    #allocation4 [shape = 'u8[8192]{0}', space=vmem, size = 0x2000, scoped, tag = 'output window, operand 0, single buffered']
    #allocation5 [shape = 's32[1]{0}', space=sflag, size = 0x4, scoped, tag = 'scoped memory for tpu_custom_call.1']
    %13 = vsyncpa [#allocation5], 0
    // Predicated region
    $region2: #{tpu_custom_call.1} parent=1 // pred_check
      _
    $region3: #{tpu_custom_call.1} parent=1 // pred_check_branch
      %15 = sbr.rel (0) target = $region5
    $region4: #{tpu_custom_call.1} parent=1 // pred_region
      _
    $region5: #{tpu_custom_call.1} parent=1 // pred_fallthru
      _
    // Predicated region
    $region6: #{tpu_custom_call.1} parent=1 // pred_check
      _
    $region7: #{tpu_custom_call.1} parent=1 // pred_check_branch
      %17 = sbr.rel (0) target = $region9
    $region8: #{tpu_custom_call.1} parent=1 // pred_region
      _
    $region9: #{tpu_custom_call.1} parent=1 // pred_fallthru
      _
    // Predicated region
    $region10: #{tpu_custom_call.1} parent=1 // pred_check
      _
    $region11: #{tpu_custom_call.1} parent=1 // pred_check_branch
      %19 = sbr.rel (0) target = $region13
    $region12: #{tpu_custom_call.1} parent=1 // pred_region
      _
    $region13: #{tpu_custom_call.1} parent=1 // pred_fallthru
      _
    // Predicated region
    $region14: #{tpu_custom_call.1} parent=1 // pred_check
      _
    $region15: #{tpu_custom_call.1} parent=1 // pred_check_branch
      %21 = sbr.rel (0) target = $region17
    $region16: #{tpu_custom_call.1} parent=1 // pred_region
      _
    $region17: #{tpu_custom_call.1} parent=1 // pred_fallthru
      _
    // Predicated region
    $region18: #{tpu_custom_call.1} parent=1 // pred_check
      _
    $region19: #{tpu_custom_call.1} parent=1 // pred_check_branch
      %23 = sbr.rel (0) target = $region21
    $region20: #{tpu_custom_call.1} parent=1 // pred_region
      _
    $region21: #{tpu_custom_call.1} parent=1 // pred_fallthru
      _
    // Predicated region
    $region22: #{tpu_custom_call.1} parent=1 // pred_check
      _
    $region23: #{tpu_custom_call.1} parent=1 // pred_check_branch
      %25 = sbr.rel (0) target = $region25
    $region24: #{tpu_custom_call.1} parent=1 // pred_region
      _
    $region25: #{tpu_custom_call.1} parent=1 // pred_fallthru
      _
    // Predicated region
    $region26: #{tpu_custom_call.1} parent=1 // pred_check
      _
    $region27: #{tpu_custom_call.1} parent=1 // pred_check_branch
      %27 = sbr.rel (0) target = $region29
    $region28: #{tpu_custom_call.1} parent=1 // pred_region
      _
    $region29: #{tpu_custom_call.1} parent=1 // pred_fallthru
      _
    // Predicated region
    $region30: #{tpu_custom_call.1} parent=1 // pred_check
      _
    $region31: #{tpu_custom_call.1} parent=1 // pred_check_branch
      %29 = sbr.rel (0) target = $region33
    $region32: #{tpu_custom_call.1} parent=1 // pred_region
      _
    $region33: #{tpu_custom_call.1} parent=1 // pred_fallthru
      _
    %v30 = vld [vmem:[%s1] sm:$0xff]
    %v31 = vld [vmem:[%s1 + $0x8] sm:$0xff]
    %v32 = vld [vmem:[%s2] sm:$0xff]
    %v33 = vld [vmem:[%s2 + $0x8] sm:$0xff]
    %v34 = vld [vmem:[%s2 + $0x10] sm:$0xff]
    %v35 = vld [vmem:[%s2 + $0x18] sm:$0xff]
    %v36 = vld [vmem:[%s2 + $0x20] sm:$0xff]
    %v37 = vld [vmem:[%s2 + $0x28] sm:$0xff]
    %v38 = vld [vmem:[%s2 + $0x30] sm:$0xff]
    %v39 = vld [vmem:[%s2 + $0x38] sm:$0xff]
    %v40 = vld [vmem:[%s2 + $0x40] sm:$0xff]
    %v41 = vld [vmem:[%s2 + $0x48] sm:$0xff]
    %v42 = vld [vmem:[%s2 + $0x50] sm:$0xff]
    %v43 = vld [vmem:[%s2 + $0x58] sm:$0xff]
    %v44 = vld [vmem:[%s2 + $0x60] sm:$0xff]
    %v45 = vld [vmem:[%s2 + $0x68] sm:$0xff]
    %v46 = vld [vmem:[%s2 + $0x70] sm:$0xff]
    %v47 = vld [vmem:[%s2 + $0x78] sm:$0xff]
    %v48 = vld [vmem:[%s3] sm:$0xff]
    %v49 = vld [vmem:[%s3 + $0x8] sm:$0xff]
    %v50 = vld [vmem:[%s3 + $0x10] sm:$0xff]
    %v51 = vld [vmem:[%s3 + $0x18] sm:$0xff]
    %v52 = vld [vmem:[%s3 + $0x20] sm:$0xff]
    %v53 = vld [vmem:[%s3 + $0x28] sm:$0xff]
    %v54 = vld [vmem:[%s3 + $0x30] sm:$0xff]
    %v55 = vld [vmem:[%s3 + $0x38] sm:$0xff]
    %v56 = vld [vmem:[%s3 + $0x40] sm:$0xff]
    %v57 = vld [vmem:[%s3 + $0x48] sm:$0xff]
    %v58 = vld [vmem:[%s3 + $0x50] sm:$0xff]
    %v59 = vld [vmem:[%s3 + $0x58] sm:$0xff]
    %v60 = vld [vmem:[%s3 + $0x60] sm:$0xff]
    %v61 = vld [vmem:[%s3 + $0x68] sm:$0xff]
    %v62 = vld [vmem:[%s3 + $0x70] sm:$0xff]
    %v63 = vld [vmem:[%s3 + $0x78] sm:$0xff]
    %65 = vset.pattern.permute.xlu0 0
    %66 = vperm.xlu0 %65, %v48
    %v67 = vpop.permute.xlu0 %66
    %70 = vset.pattern.permute.xlu0 0
    %71 = vperm.xlu0 %70, %v49
    %v72 = vpop.permute.xlu0 %71
    %75 = vset.pattern.permute.xlu0 0
    %76 = vperm.xlu0 %75, %v50
    %v77 = vpop.permute.xlu0 %76
    %80 = vset.pattern.permute.xlu0 0
    %81 = vperm.xlu0 %80, %v51
    %v82 = vpop.permute.xlu0 %81
    %85 = vset.pattern.permute.xlu0 0
    %86 = vperm.xlu0 %85, %v52
    %v87 = vpop.permute.xlu0 %86
    %90 = vset.pattern.permute.xlu0 0
    %91 = vperm.xlu0 %90, %v53
    %v92 = vpop.permute.xlu0 %91
    %95 = vset.pattern.permute.xlu0 0
    %96 = vperm.xlu0 %95, %v54
    %v97 = vpop.permute.xlu0 %96
    %100 = vset.pattern.permute.xlu0 0
    %101 = vperm.xlu0 %100, %v55
    %v102 = vpop.permute.xlu0 %101
    %105 = vset.pattern.permute.xlu0 0
    %106 = vperm.xlu0 %105, %v56
    %v107 = vpop.permute.xlu0 %106
    %110 = vset.pattern.permute.xlu0 0
    %111 = vperm.xlu0 %110, %v57
    %v112 = vpop.permute.xlu0 %111
    %115 = vset.pattern.permute.xlu0 0
    %116 = vperm.xlu0 %115, %v58
    %v117 = vpop.permute.xlu0 %116
    %120 = vset.pattern.permute.xlu0 0
    %121 = vperm.xlu0 %120, %v59
    %v122 = vpop.permute.xlu0 %121
    %125 = vset.pattern.permute.xlu0 0
    %126 = vperm.xlu0 %125, %v60
    %v127 = vpop.permute.xlu0 %126
    %130 = vset.pattern.permute.xlu0 0
    %131 = vperm.xlu0 %130, %v61
    %v132 = vpop.permute.xlu0 %131
    %135 = vset.pattern.permute.xlu0 0
    %136 = vperm.xlu0 %135, %v62
    %v137 = vpop.permute.xlu0 %136
    %140 = vset.pattern.permute.xlu0 0
    %141 = vperm.xlu0 %140, %v63
    %v142 = vpop.permute.xlu0 %141
    %vm144 = vcmask 130048
    %v146 = vsel %vm144, %v32, 0
    %v149 = vsel %vm144, %v33, 0
    %v152 = vsel %vm144, %v34, 0
    %v155 = vsel %vm144, %v35, 0
    %v158 = vsel %vm144, %v36, 0
    %v161 = vsel %vm144, %v37, 0
    %v164 = vsel %vm144, %v38, 0
    %v167 = vsel %vm144, %v39, 0
    %v170 = vsel %vm144, %v40, 0
    %v173 = vsel %vm144, %v41, 0
    %v176 = vsel %vm144, %v42, 0
    %v179 = vsel %vm144, %v43, 0
    %v182 = vsel %vm144, %v44, 0
    %v185 = vsel %vm144, %v45, 0
    %v188 = vsel %vm144, %v46, 0
    %v191 = vsel %vm144, %v47, 0
    %193 = vmatpush.msra.mxu0 0.0
    %194 = vmatpush.msra.mxu0 0.0
    %195 = vmatpush.msra.mxu0 0.0
    %196 = vmatpush.msra.mxu0 0.0
    %197 = vmatpush.msra.mxu0 0.0
    %198 = vmatpush.msra.mxu0 0.0
    %199 = vmatpush.msra.mxu0 0.0
    %200 = vmatpush.msra.mxu0 0.0
    %201 = vmatpush.msra.mxu0 0.0
    %202 = vmatpush.msra.mxu0 0.0
    %203 = vmatpush.msra.mxu0 0.0
    %204 = vmatpush.msra.mxu0 0.0
    %205 = vmatpush.msra.mxu0 0.0
    %206 = vmatpush.msra.mxu0 0.0
    %207 = vmatpush.msra.mxu0 %v31
    %208 = vmatpush.msra.mxu0 %v30
    %209 = vmatmul.f32.gmra.mxu0 %v146
    %v210 = vpop.f32.mrf.mxu0
    %v211 = vadd.f32 %v67, %v210
    %212 = vmatmul.f32.gmra.mxu0 %v149
    %v213 = vpop.f32.mrf.mxu0
    %v214 = vadd.f32 %v72, %v213
    %215 = vmatmul.f32.gmra.mxu0 %v152
    %v216 = vpop.f32.mrf.mxu0
    %v217 = vadd.f32 %v77, %v216
    %218 = vmatmul.f32.gmra.mxu0 %v155
    %v219 = vpop.f32.mrf.mxu0
    %v220 = vadd.f32 %v82, %v219
    %221 = vmatmul.f32.gmra.mxu0 %v158
    %v222 = vpop.f32.mrf.mxu0
    %v223 = vadd.f32 %v87, %v222
    %224 = vmatmul.f32.gmra.mxu0 %v161
    %v225 = vpop.f32.mrf.mxu0
    %v226 = vadd.f32 %v92, %v225
    %227 = vmatmul.f32.gmra.mxu0 %v164
    %v228 = vpop.f32.mrf.mxu0
    %v229 = vadd.f32 %v97, %v228
    %230 = vmatmul.f32.gmra.mxu0 %v167
    %v231 = vpop.f32.mrf.mxu0
    %v232 = vadd.f32 %v102, %v231
    %233 = vmatmul.f32.gmra.mxu0 %v170
    %v234 = vpop.f32.mrf.mxu0
    %v235 = vadd.f32 %v107, %v234
    %236 = vmatmul.f32.gmra.mxu0 %v173
    %v237 = vpop.f32.mrf.mxu0
    %v238 = vadd.f32 %v112, %v237
    %239 = vmatmul.f32.gmra.mxu0 %v176
    %v240 = vpop.f32.mrf.mxu0
    %v241 = vadd.f32 %v117, %v240
    %242 = vmatmul.f32.gmra.mxu0 %v179
    %v243 = vpop.f32.mrf.mxu0
    %v244 = vadd.f32 %v122, %v243
    %245 = vmatmul.f32.gmra.mxu0 %v182
    %v246 = vpop.f32.mrf.mxu0
    %v247 = vadd.f32 %v127, %v246
    %248 = vmatmul.f32.gmra.mxu0 %v185
    %v249 = vpop.f32.mrf.mxu0
    %v250 = vadd.f32 %v132, %v249
    %251 = vmatmul.f32.gmra.mxu0 %v188
    %v252 = vpop.f32.mrf.mxu0
    %v253 = vadd.f32 %v137, %v252
    %254 = vmatmul.f32.gmra.mxu0 %v191
    %v255 = vpop.f32.mrf.mxu0
    %v256 = vadd.f32 %v142, %v255
    %257 = vdwg.mxu0
    %vm258 = vcmask 261120
    %v259 = vsel %vm258, %v211, -inf
    %v260 = vsel %vm258, %v214, -inf
    %v261 = vsel %vm258, %v217, -inf
    %v262 = vsel %vm258, %v220, -inf
    %v263 = vsel %vm258, %v223, -inf
    %v264 = vmax.f32 %v259, %v263
    %v265 = vsel %vm258, %v226, -inf
    %v266 = vmax.f32 %v260, %v265
    %v267 = vsel %vm258, %v229, -inf
    %v268 = vmax.f32 %v261, %v267
    %v269 = vsel %vm258, %v232, -inf
    %v270 = vmax.f32 %v262, %v269
    %v271 = vsel %vm258, %v235, -inf
    %v272 = vmax.f32 %v264, %v271
    %v273 = vsel %vm258, %v238, -inf
    %v274 = vmax.f32 %v266, %v273
    %v275 = vsel %vm258, %v241, -inf
    %v276 = vmax.f32 %v268, %v275
    %v277 = vsel %vm258, %v244, -inf
    %v278 = vmax.f32 %v270, %v277
    %v279 = vsel %vm258, %v247, -inf
    %v280 = vmax.f32 %v272, %v279
    %v281 = vsel %vm258, %v250, -inf
    %v282 = vmax.f32 %v274, %v281
    %v283 = vsel %vm258, %v253, -inf
    %v284 = vmax.f32 %v276, %v283
    %v285 = vsel %vm258, %v256, -inf
    %v286 = vmax.f32 %v278, %v285
    %v287 = vmax.f32 %v280, %v282
    %v288 = vmax.f32 %v284, %v286
    %v289 = vmax.f32 %v287, %v288
    %v290 = vrot.slane %v289, 4
    %v291 = vmax.f32 %v289, %v290
    %v292 = vrot.slane %v291, 2
    %v293 = vmax.f32 %v291, %v292
    %v294 = vrot.slane %v293, 1
    %v295 = vmax.f32 %v293, %v294
    %v296 = vsub.f32 %v211, %v295
    %v297 = vsub.f32 %v214, %v295
    %v298 = vsub.f32 %v217, %v295
    %v299 = vsub.f32 %v220, %v295
    %v300 = vsub.f32 %v223, %v295
    %v301 = vsub.f32 %v226, %v295
    %v302 = vsub.f32 %v229, %v295
    %v303 = vsub.f32 %v232, %v295
    %v304 = vsub.f32 %v235, %v295
    %v305 = vsub.f32 %v238, %v295
    %v306 = vsub.f32 %v241, %v295
    %v307 = vsub.f32 %v244, %v295
    %v308 = vsub.f32 %v247, %v295
    %v309 = vsub.f32 %v250, %v295
    %v310 = vsub.f32 %v253, %v295
    %v311 = vsub.f32 %v256, %v295
    %v312 = vmul.f32 %v296, 1.442695
    %v313 = vpow.pop %v312
    %v314 = vmul.f32 %v297, 1.442695
    %v315 = vpow.pop %v314
    %v316 = vmul.f32 %v298, 1.442695
    %v317 = vpow.pop %v316
    %v318 = vmul.f32 %v299, 1.442695
    %v319 = vpow.pop %v318
    %v320 = vmul.f32 %v300, 1.442695
    %v321 = vpow.pop %v320
    %v322 = vmul.f32 %v301, 1.442695
    %v323 = vpow.pop %v322
    %v324 = vmul.f32 %v302, 1.442695
    %v325 = vpow.pop %v324
    %v326 = vmul.f32 %v303, 1.442695
    %v327 = vpow.pop %v326
    %v328 = vmul.f32 %v304, 1.442695
    %v329 = vpow.pop %v328
    %v330 = vmul.f32 %v305, 1.442695
    %v331 = vpow.pop %v330
    %v332 = vmul.f32 %v306, 1.442695
    %v333 = vpow.pop %v332
    %v334 = vmul.f32 %v307, 1.442695
    %v335 = vpow.pop %v334
    %v336 = vmul.f32 %v308, 1.442695
    %v337 = vpow.pop %v336
    %v338 = vmul.f32 %v309, 1.442695
    %v339 = vpow.pop %v338
    %v340 = vmul.f32 %v310, 1.442695
    %v341 = vpow.pop %v340
    %v342 = vmul.f32 %v311, 1.442695
    %v343 = vpow.pop %v342
    %v344 = vsel %vm258, %v313, 0.0
    %v345 = vsel %vm258, %v315, 0.0
    %v346 = vadd.f32 %v344, %v345
    %v347 = vsel %vm258, %v317, 0.0
    %v348 = vadd.f32 %v346, %v347
    %v349 = vsel %vm258, %v319, 0.0
    %v350 = vadd.f32 %v348, %v349
    %v351 = vsel %vm258, %v321, 0.0
    %v352 = vadd.f32 %v350, %v351
    %v353 = vsel %vm258, %v323, 0.0
    %v354 = vadd.f32 %v352, %v353
    %v355 = vsel %vm258, %v325, 0.0
    %v356 = vadd.f32 %v354, %v355
    %v357 = vsel %vm258, %v327, 0.0
    %v358 = vadd.f32 %v356, %v357
    %v359 = vsel %vm258, %v329, 0.0
    %v360 = vadd.f32 %v358, %v359
    %v361 = vsel %vm258, %v331, 0.0
    %v362 = vadd.f32 %v360, %v361
    %v363 = vsel %vm258, %v333, 0.0
    %v364 = vadd.f32 %v362, %v363
    %v365 = vsel %vm258, %v335, 0.0
    %v366 = vadd.f32 %v364, %v365
    %v367 = vsel %vm258, %v337, 0.0
    %v368 = vadd.f32 %v366, %v367
    %v369 = vsel %vm258, %v339, 0.0
    %v370 = vadd.f32 %v368, %v369
    %v371 = vsel %vm258, %v341, 0.0
    %v372 = vadd.f32 %v370, %v371
    %v373 = vsel %vm258, %v343, 0.0
    %v374 = vadd.f32 %v372, %v373
    %v375 = vrot.slane %v374, 4
    %v376 = vadd.f32 %v374, %v375
    %v377 = vrot.slane %v376, 2
    %v378 = vadd.f32 %v376, %v377
    %v379 = vrot.slane %v378, 1
    %v380 = vadd.f32 %v378, %v379
    %v381 = vrcp.pop %v380
    %v382 = vmul.f32 %v380, %v381
    %v383 = vsub.f32 1.0, %v382
    %v384 = vmul.f32 %v381, %v383
    %v385 = vadd.f32 %v381, %v384
    %vm386 = vweird.f32 %v380
    %vm387 = vweird.f32 %v381
    %vm388 = vmor %vm386, %vm387
    %v389 = vsel %vm388, %v381, %v385
    %v390 = vand.u32 2147483647, %v380
    %vm391 = vcmp.eq.f32.partialorder %v390, 8.507059e+37
    %v392 = vand.u32 %v380, 2147483648
    %v393 = vor.u32 1.1754944e-38, %v392
    %v394 = vsel %vm391, %v393, %v389
    %v395 = vmul.f32 %v313, %v394
    %v396 = vmul.f32 %v315, %v394
    %v397 = vmul.f32 %v317, %v394
    %v398 = vmul.f32 %v319, %v394
    %v399 = vmul.f32 %v321, %v394
    %v400 = vmul.f32 %v323, %v394
    %v401 = vmul.f32 %v325, %v394
    %v402 = vmul.f32 %v327, %v394
    %v403 = vmul.f32 %v329, %v394
    %v404 = vmul.f32 %v331, %v394
    %v405 = vmul.f32 %v333, %v394
    %v406 = vmul.f32 %v335, %v394
    %v407 = vmul.f32 %v337, %v394
    %v408 = vmul.f32 %v339, %v394
    %v409 = vmul.f32 %v341, %v394
    %v410 = vmul.f32 %v343, %v394
    %v411 = vld [vmem:[%s0] sm:$0xff]
    %v412 = vld [vmem:[%s0 + $0x8] sm:$0xff]
    %413 = vmatpush.msra.mxu0 %v410
    %414 = vmatpush.msra.mxu0 %v409
    %415 = vmatpush.msra.mxu0 %v408
    %416 = vmatpush.msra.mxu0 %v407
    %417 = vmatpush.msra.mxu0 %v406
    %418 = vmatpush.msra.mxu0 %v405
    %419 = vmatpush.msra.mxu0 %v404
    %420 = vmatpush.msra.mxu0 %v403
    %421 = vmatpush.msra.mxu0 %v402
    %422 = vmatpush.msra.mxu0 %v401
    %423 = vmatpush.msra.mxu0 %v400
    %424 = vmatpush.msra.mxu0 %v399
    %425 = vmatpush.msra.mxu0 %v398
    %426 = vmatpush.msra.mxu0 %v397
    %427 = vmatpush.msra.mxu0 %v396
    %428 = vmatpush.msra.mxu0 %v395
    %429 = vmatmul.f32.gmra.mxu0 %v411
    %v430 = vpop.f32.mrf.mxu0
    %v431 = vadd.f32 0.0, %v430
    %432 = vmatmul.f32.gmra.mxu0 %v412
    %v433 = vpop.f32.mrf.mxu0
    %v434 = vadd.f32 0.0, %v433
    %435 = vdwg.mxu0
    %436 = vst.msk [vmem:[#allocation2] sm:$0xff] %vm144, %v431
    %437 = vst.msk [vmem:[#allocation2 + $0x8] sm:$0xff] %vm144, %v434
    %s438 = scalar_lea.vmem %s0, 16
    %v439 = vld [vmem:[%s438] sm:$0xff]
    %v440 = vld [vmem:[%s438 + $0x8] sm:$0xff]
    %457 = vrot.lane.b32.xlu0 %v395, 112
    %v458 = vpop.permute.xlu0 %457
    %459 = vrot.lane.b32.xlu0 %v396, 112
    %v460 = vpop.permute.xlu0 %459
    %461 = vrot.lane.b32.xlu0 %v397, 112
    %v462 = vpop.permute.xlu0 %461
    %463 = vrot.lane.b32.xlu0 %v398, 112
    %v464 = vpop.permute.xlu0 %463
    %465 = vrot.lane.b32.xlu0 %v399, 112
    %v466 = vpop.permute.xlu0 %465
    %467 = vrot.lane.b32.xlu0 %v400, 112
    %v468 = vpop.permute.xlu0 %467
    %469 = vrot.lane.b32.xlu0 %v401, 112
    %v470 = vpop.permute.xlu0 %469
    %471 = vrot.lane.b32.xlu0 %v402, 112
    %v472 = vpop.permute.xlu0 %471
    %473 = vrot.lane.b32.xlu0 %v403, 112
    %v474 = vpop.permute.xlu0 %473
    %475 = vrot.lane.b32.xlu0 %v404, 112
    %v476 = vpop.permute.xlu0 %475
    %477 = vrot.lane.b32.xlu0 %v405, 112
    %v478 = vpop.permute.xlu0 %477
    %479 = vrot.lane.b32.xlu0 %v406, 112
    %v480 = vpop.permute.xlu0 %479
    %481 = vrot.lane.b32.xlu0 %v407, 112
    %v482 = vpop.permute.xlu0 %481
    %483 = vrot.lane.b32.xlu0 %v408, 112
    %v484 = vpop.permute.xlu0 %483
    %485 = vrot.lane.b32.xlu0 %v409, 112
    %v486 = vpop.permute.xlu0 %485
    %487 = vrot.lane.b32.xlu0 %v410, 112
    %v488 = vpop.permute.xlu0 %487
    %505 = vmatpush.msra.mxu0 %v488
    %506 = vmatpush.msra.mxu0 %v486
    %507 = vmatpush.msra.mxu0 %v484
    %508 = vmatpush.msra.mxu0 %v482
    %509 = vmatpush.msra.mxu0 %v480
    %510 = vmatpush.msra.mxu0 %v478
    %511 = vmatpush.msra.mxu0 %v476
    %512 = vmatpush.msra.mxu0 %v474
    %513 = vmatpush.msra.mxu0 %v472
    %514 = vmatpush.msra.mxu0 %v470
    %515 = vmatpush.msra.mxu0 %v468
    %516 = vmatpush.msra.mxu0 %v466
    %517 = vmatpush.msra.mxu0 %v464
    %518 = vmatpush.msra.mxu0 %v462
    %519 = vmatpush.msra.mxu0 %v460
    %520 = vmatpush.msra.mxu0 %v458
    %521 = vmatmul.f32.gmra.mxu0 %v439
    %v522 = vpop.f32.mrf.mxu0
    %v523 = vadd.f32 0.0, %v522
    %524 = vmatmul.f32.gmra.mxu0 %v440
    %v525 = vpop.f32.mrf.mxu0
    %v526 = vadd.f32 0.0, %v525
    %527 = vdwg.mxu0
    %530 = vrot.lane.b32.xlu0 %v523, 16
    %v531 = vpop.permute.xlu0 %530
    %532 = vrot.lane.b32.xlu0 %v526, 16
    %v533 = vpop.permute.xlu0 %532
    %vm536 = vcmask 261248
    %537 = vst.msk [vmem:[#allocation2] sm:$0xff] %vm536, %v531
    %538 = vst.msk [vmem:[#allocation2 + $0x8] sm:$0xff] %vm536, %v533
    %v539 = vld [vmem:[#allocation2] sm:$0xff]
    %v540 = vld [vmem:[#allocation2 + $0x8] sm:$0xff]
    %v541 = vadd.f32 %v30, %v539
    %v542 = vadd.f32 %v31, %v540
    %v543 = vld [vmem:[%s4] sm:$0xff]
    %v544 = vld [vmem:[%s4 + $0x8] sm:$0xff]
    %v545 = vld [vmem:[%s4 + $0x10] sm:$0xff]
    %v546 = vld [vmem:[%s4 + $0x18] sm:$0xff]
    %v547 = vld [vmem:[%s5] sm:$0xff]
    %v548 = vld [vmem:[%s5 + $0x8] sm:$0xff]
    %v549 = vld [vmem:[%s5 + $0x10] sm:$0xff]
    %v550 = vld [vmem:[%s5 + $0x18] sm:$0xff]
    %552 = vset.pattern.permute.xlu0 0
    %553 = vperm.xlu0 %552, %v547
    %v554 = vpop.permute.xlu0 %553
    %557 = vset.pattern.permute.xlu0 0
    %558 = vperm.xlu0 %557, %v548
    %v559 = vpop.permute.xlu0 %558
    %562 = vset.pattern.permute.xlu0 0
    %563 = vperm.xlu0 %562, %v549
    %v564 = vpop.permute.xlu0 %563
    %567 = vset.pattern.permute.xlu0 0
    %568 = vperm.xlu0 %567, %v550
    %v569 = vpop.permute.xlu0 %568
    %v572 = vsel %vm144, %v543, 0
    %v575 = vsel %vm144, %v544, 0
    %v578 = vsel %vm144, %v545, 0
    %v581 = vsel %vm144, %v546, 0
    %583 = vmatpush.msra.mxu0 0.0
    %584 = vmatpush.msra.mxu0 0.0
    %585 = vmatpush.msra.mxu0 0.0
    %586 = vmatpush.msra.mxu0 0.0
    %587 = vmatpush.msra.mxu0 0.0
    %588 = vmatpush.msra.mxu0 0.0
    %589 = vmatpush.msra.mxu0 0.0
    %590 = vmatpush.msra.mxu0 0.0
    %591 = vmatpush.msra.mxu0 0.0
    %592 = vmatpush.msra.mxu0 0.0
    %593 = vmatpush.msra.mxu0 0.0
    %594 = vmatpush.msra.mxu0 0.0
    %595 = vmatpush.msra.mxu0 0.0
    %596 = vmatpush.msra.mxu0 0.0
    %597 = vmatpush.msra.mxu0 %v542
    %598 = vmatpush.msra.mxu0 %v541
    %599 = vmatmul.f32.gmra.mxu0 %v572
    %v600 = vpop.f32.mrf.mxu0
    %v601 = vadd.f32 %v554, %v600
    %602 = vmatmul.f32.gmra.mxu0 %v575
    %v603 = vpop.f32.mrf.mxu0
    %v604 = vadd.f32 %v559, %v603
    %605 = vmatmul.f32.gmra.mxu0 %v578
    %v606 = vpop.f32.mrf.mxu0
    %v607 = vadd.f32 %v564, %v606
    %608 = vmatmul.f32.gmra.mxu0 %v581
    %v609 = vpop.f32.mrf.mxu0
    %v610 = vadd.f32 %v569, %v609
    %611 = vdwg.mxu0
    %612 = vxpose.xlu0.b32.start [1/16] %v601, 128
    %613 = vxpose.xlu0.b32.cont [2/16] 0.0, 128
    %614 = vxpose.xlu0.b32.cont [3/16] 0.0, 128
    %615 = vxpose.xlu0.b32.cont [4/16] 0.0, 128
    %616 = vxpose.xlu0.b32.cont [5/16] 0.0, 128
    %617 = vxpose.xlu0.b32.cont [6/16] 0.0, 128
    %618 = vxpose.xlu0.b32.cont [7/16] 0.0, 128
    %619 = vxpose.xlu0.b32.cont [8/16] 0.0, 128
    %620 = vxpose.xlu0.b32.cont [9/16] 0.0, 128
    %621 = vxpose.xlu0.b32.cont [10/16] 0.0, 128
    %622 = vxpose.xlu0.b32.cont [11/16] 0.0, 128
    %623 = vxpose.xlu0.b32.cont [12/16] 0.0, 128
    %624 = vxpose.xlu0.b32.cont [13/16] 0.0, 128
    %625 = vxpose.xlu0.b32.cont [14/16] 0.0, 128
    %626 = vxpose.xlu0.b32.cont [15/16] 0.0, 128
    %627 = vxpose.xlu0.b32.end [16/16] 0.0, 128
    %v628 = vpop.trf.xlu0
    %v629 = vpop.trf.xlu0
    %v630 = vpop.trf.xlu0
    %v631 = vpop.trf.xlu0
    %v632 = vpop.trf.xlu0
    %v633 = vpop.trf.xlu0
    %v634 = vpop.trf.xlu0
    %v635 = vpop.trf.xlu0
    %v636 = vpop.trf.xlu0
    %v637 = vpop.trf.xlu0
    %v638 = vpop.trf.xlu0
    %v639 = vpop.trf.xlu0
    %v640 = vpop.trf.xlu0
    %v641 = vpop.trf.xlu0
    %v642 = vpop.trf.xlu0
    %v643 = vpop.trf.xlu0
    %vm644 = vcmask 64512
    %v646 = vsel %vm644, %v628, 0
    %v649 = vsel %vm644, %v629, 0
    %651 = vmatpush.msra.mxu0 0.0
    %652 = vmatpush.msra.mxu0 0.0
    %653 = vmatpush.msra.mxu0 0.0
    %654 = vmatpush.msra.mxu0 0.0
    %655 = vmatpush.msra.mxu0 0.0
    %656 = vmatpush.msra.mxu0 0.0
    %657 = vmatpush.msra.mxu0 0.0
    %658 = vmatpush.msra.mxu0 0.0
    %659 = vmatpush.msra.mxu0 0.0
    %660 = vmatpush.msra.mxu0 0.0
    %661 = vmatpush.msra.mxu0 0.0
    %662 = vmatpush.msra.mxu0 0.0
    %663 = vmatpush.msra.mxu0 0.0
    %664 = vmatpush.msra.mxu0 0.0
    %665 = vmatpush.msra.mxu0 0.0
    %666 = vmatpush.msra.mxu0 %v604
    %667 = vmatmul.f32.gmra.mxu0 %v646
    %v668 = vpop.f32.mrf.mxu0
    %v669 = vadd.f32 0.0, %v668
    %670 = vmatmul.f32.gmra.mxu0 %v649
    %v671 = vpop.f32.mrf.mxu0
    %v672 = vadd.f32 0.0, %v671
    %673 = vdwg.mxu0
    %v674 = vsel %vm144, %v669, -inf
    %v675 = vsel %vm144, %v672, -inf
    %v676 = vmax.f32 %v674, %v675
    %v677 = vrot.slane %v676, 4
    %v678 = vmax.f32 %v676, %v677
    %v679 = vrot.slane %v678, 2
    %v680 = vmax.f32 %v678, %v679
    %v681 = vrot.slane %v680, 1
    %v682 = vmax.f32 %v680, %v681
    %v683 = vsub.f32 %v669, %v682
    %v684 = vsub.f32 %v672, %v682
    %v685 = vmul.f32 %v683, 1.442695
    %v686 = vpow.pop %v685
    %v687 = vmul.f32 %v684, 1.442695
    %v688 = vpow.pop %v687
    %v689 = vsel %vm144, %v686, 0.0
    %v690 = vsel %vm144, %v688, 0.0
    %v691 = vadd.f32 %v689, %v690
    %v692 = vrot.slane %v691, 4
    %v693 = vadd.f32 %v691, %v692
    %v694 = vrot.slane %v693, 2
    %v695 = vadd.f32 %v693, %v694
    %v696 = vrot.slane %v695, 1
    %v697 = vadd.f32 %v695, %v696
    %v698 = vrcp.pop %v697
    %v699 = vmul.f32 %v697, %v698
    %v700 = vsub.f32 1.0, %v699
    %v701 = vmul.f32 %v698, %v700
    %v702 = vadd.f32 %v698, %v701
    %vm703 = vweird.f32 %v697
    %vm704 = vweird.f32 %v698
    %vm705 = vmor %vm703, %vm704
    %v706 = vsel %vm705, %v698, %v702
    %v707 = vand.u32 2147483647, %v697
    %vm708 = vcmp.eq.f32.partialorder %v707, 8.507059e+37
    %v709 = vand.u32 %v697, 2147483648
    %v710 = vor.u32 1.1754944e-38, %v709
    %v711 = vsel %vm708, %v710, %v706
    %v712 = vmul.f32 %v686, %v711
    %v713 = vmul.f32 %v688, %v711
    %v715 = vsel %vm144, %v607, 0
    %v718 = vsel %vm144, %v610, 0
    %720 = vmatpush.msra.mxu0 0.0
    %721 = vmatpush.msra.mxu0 0.0
    %722 = vmatpush.msra.mxu0 0.0
    %723 = vmatpush.msra.mxu0 0.0
    %724 = vmatpush.msra.mxu0 0.0
    %725 = vmatpush.msra.mxu0 0.0
    %726 = vmatpush.msra.mxu0 0.0
    %727 = vmatpush.msra.mxu0 0.0
    %728 = vmatpush.msra.mxu0 0.0
    %729 = vmatpush.msra.mxu0 0.0
    %730 = vmatpush.msra.mxu0 0.0
    %731 = vmatpush.msra.mxu0 0.0
    %732 = vmatpush.msra.mxu0 0.0
    %733 = vmatpush.msra.mxu0 0.0
    %734 = vmatpush.msra.mxu0 %v713
    %735 = vmatpush.msra.mxu0 %v712
    %736 = vmatmul.f32.gmra.mxu0 %v715
    %v737 = vpop.f32.mrf.mxu0
    %v738 = vadd.f32 0.0, %v737
    %739 = vmatmul.f32.gmra.mxu0 %v718
    %v740 = vpop.f32.mrf.mxu0
    %v741 = vadd.f32 0.0, %v740
    %742 = vdwg.mxu0
    %743 = vst.msk [vmem:[#allocation3] sm:$0xff] %vm144, %v738
    %744 = vst.msk [vmem:[#allocation3 + $0x8] sm:$0xff] %vm144, %v741
    %746 = vrot.lane.b32.xlu0 %v601, 112
    %v747 = vpop.permute.xlu0 %746
    %749 = vxpose.xlu0.b32.start [1/16] %v747, 128
    %750 = vxpose.xlu0.b32.cont [2/16] 0.0, 128
    %751 = vxpose.xlu0.b32.cont [3/16] 0.0, 128
    %752 = vxpose.xlu0.b32.cont [4/16] 0.0, 128
    %753 = vxpose.xlu0.b32.cont [5/16] 0.0, 128
    %754 = vxpose.xlu0.b32.cont [6/16] 0.0, 128
    %755 = vxpose.xlu0.b32.cont [7/16] 0.0, 128
    %756 = vxpose.xlu0.b32.cont [8/16] 0.0, 128
    %757 = vxpose.xlu0.b32.cont [9/16] 0.0, 128
    %758 = vxpose.xlu0.b32.cont [10/16] 0.0, 128
    %759 = vxpose.xlu0.b32.cont [11/16] 0.0, 128
    %760 = vxpose.xlu0.b32.cont [12/16] 0.0, 128
    %761 = vxpose.xlu0.b32.cont [13/16] 0.0, 128
    %762 = vxpose.xlu0.b32.cont [14/16] 0.0, 128
    %763 = vxpose.xlu0.b32.cont [15/16] 0.0, 128
    %764 = vxpose.xlu0.b32.end [16/16] 0.0, 128
    %v765 = vpop.trf.xlu0
    %v766 = vpop.trf.xlu0
    %v767 = vpop.trf.xlu0
    %v768 = vpop.trf.xlu0
    %v769 = vpop.trf.xlu0
    %v770 = vpop.trf.xlu0
    %v771 = vpop.trf.xlu0
    %v772 = vpop.trf.xlu0
    %v773 = vpop.trf.xlu0
    %v774 = vpop.trf.xlu0
    %v775 = vpop.trf.xlu0
    %v776 = vpop.trf.xlu0
    %v777 = vpop.trf.xlu0
    %v778 = vpop.trf.xlu0
    %v779 = vpop.trf.xlu0
    %v780 = vpop.trf.xlu0
    %782 = vrot.lane.b32.xlu0 %v604, 112
    %v783 = vpop.permute.xlu0 %782
    %v786 = vsel %vm644, %v765, 0
    %v789 = vsel %vm644, %v766, 0
    %791 = vmatpush.msra.mxu0 0.0
    %792 = vmatpush.msra.mxu0 0.0
    %793 = vmatpush.msra.mxu0 0.0
    %794 = vmatpush.msra.mxu0 0.0
    %795 = vmatpush.msra.mxu0 0.0
    %796 = vmatpush.msra.mxu0 0.0
    %797 = vmatpush.msra.mxu0 0.0
    %798 = vmatpush.msra.mxu0 0.0
    %799 = vmatpush.msra.mxu0 0.0
    %800 = vmatpush.msra.mxu0 0.0
    %801 = vmatpush.msra.mxu0 0.0
    %802 = vmatpush.msra.mxu0 0.0
    %803 = vmatpush.msra.mxu0 0.0
    %804 = vmatpush.msra.mxu0 0.0
    %805 = vmatpush.msra.mxu0 0.0
    %806 = vmatpush.msra.mxu0 %v783
    %807 = vmatmul.f32.gmra.mxu0 %v786
    %v808 = vpop.f32.mrf.mxu0
    %v809 = vadd.f32 0.0, %v808
    %810 = vmatmul.f32.gmra.mxu0 %v789
    %v811 = vpop.f32.mrf.mxu0
    %v812 = vadd.f32 0.0, %v811
    %813 = vdwg.mxu0
    %v814 = vsel %vm144, %v809, -inf
    %v815 = vsel %vm144, %v812, -inf
    %v816 = vmax.f32 %v814, %v815
    %v817 = vrot.slane %v816, 4
    %v818 = vmax.f32 %v816, %v817
    %v819 = vrot.slane %v818, 2
    %v820 = vmax.f32 %v818, %v819
    %v821 = vrot.slane %v820, 1
    %v822 = vmax.f32 %v820, %v821
    %v823 = vsub.f32 %v809, %v822
    %v824 = vsub.f32 %v812, %v822
    %v825 = vmul.f32 %v823, 1.442695
    %v826 = vpow.pop %v825
    %v827 = vmul.f32 %v824, 1.442695
    %v828 = vpow.pop %v827
    %v829 = vsel %vm144, %v826, 0.0
    %v830 = vsel %vm144, %v828, 0.0
    %v831 = vadd.f32 %v829, %v830
    %v832 = vrot.slane %v831, 4
    %v833 = vadd.f32 %v831, %v832
    %v834 = vrot.slane %v833, 2
    %v835 = vadd.f32 %v833, %v834
    %v836 = vrot.slane %v835, 1
    %v837 = vadd.f32 %v835, %v836
    %v838 = vrcp.pop %v837
    %v839 = vmul.f32 %v837, %v838
    %v840 = vsub.f32 1.0, %v839
    %v841 = vmul.f32 %v838, %v840
    %v842 = vadd.f32 %v838, %v841
    %vm843 = vweird.f32 %v837
    %vm844 = vweird.f32 %v838
    %vm845 = vmor %vm843, %vm844
    %v846 = vsel %vm845, %v838, %v842
    %v847 = vand.u32 2147483647, %v837
    %vm848 = vcmp.eq.f32.partialorder %v847, 8.507059e+37
    %v849 = vand.u32 %v837, 2147483648
    %v850 = vor.u32 1.1754944e-38, %v849
    %v851 = vsel %vm848, %v850, %v846
    %v852 = vmul.f32 %v826, %v851
    %v853 = vmul.f32 %v828, %v851
    %854 = vrot.lane.b32.xlu0 %v607, 112
    %v855 = vpop.permute.xlu0 %854
    %856 = vrot.lane.b32.xlu0 %v610, 112
    %v857 = vpop.permute.xlu0 %856
    %v858 = vsel %vm144, %v855, 0
    %v860 = vsel %vm144, %v857, 0
    %862 = vmatpush.msra.mxu0 0.0
    %863 = vmatpush.msra.mxu0 0.0
    %864 = vmatpush.msra.mxu0 0.0
    %865 = vmatpush.msra.mxu0 0.0
    %866 = vmatpush.msra.mxu0 0.0
    %867 = vmatpush.msra.mxu0 0.0
    %868 = vmatpush.msra.mxu0 0.0
    %869 = vmatpush.msra.mxu0 0.0
    %870 = vmatpush.msra.mxu0 0.0
    %871 = vmatpush.msra.mxu0 0.0
    %872 = vmatpush.msra.mxu0 0.0
    %873 = vmatpush.msra.mxu0 0.0
    %874 = vmatpush.msra.mxu0 0.0
    %875 = vmatpush.msra.mxu0 0.0
    %876 = vmatpush.msra.mxu0 %v853
    %877 = vmatpush.msra.mxu0 %v852
    %878 = vmatmul.f32.gmra.mxu0 %v858
    %v879 = vpop.f32.mrf.mxu0
    %v880 = vadd.f32 0.0, %v879
    %881 = vmatmul.f32.gmra.mxu0 %v860
    %v882 = vpop.f32.mrf.mxu0
    %v883 = vadd.f32 0.0, %v882
    %884 = vdwg.mxu0
    %887 = vrot.lane.b32.xlu0 %v880, 16
    %v888 = vpop.permute.xlu0 %887
    %889 = vrot.lane.b32.xlu0 %v883, 16
    %v890 = vpop.permute.xlu0 %889
    %893 = vst.msk [vmem:[#allocation3] sm:$0xff] %vm536, %v888
    %894 = vst.msk [vmem:[#allocation3 + $0x8] sm:$0xff] %vm536, %v890
    %v895 = vld [vmem:[#allocation3] sm:$0xff]
    %v896 = vld [vmem:[#allocation3 + $0x8] sm:$0xff]
    %v897 = vadd.f32 %v895, %v30
    %v898 = vadd.f32 %v896, %v31
    %v899 = vld [vmem:[%s6] sm:$0xff]
    %v900 = vld [vmem:[%s6 + $0x8] sm:$0xff]
    %v902 = vsel %vm144, %v899, 0
    %v905 = vsel %vm144, %v900, 0
    %907 = vmatpush.msra.mxu0 0.0
    %908 = vmatpush.msra.mxu0 0.0
    %909 = vmatpush.msra.mxu0 0.0
    %910 = vmatpush.msra.mxu0 0.0
    %911 = vmatpush.msra.mxu0 0.0
    %912 = vmatpush.msra.mxu0 0.0
    %913 = vmatpush.msra.mxu0 0.0
    %914 = vmatpush.msra.mxu0 0.0
    %915 = vmatpush.msra.mxu0 0.0
    %916 = vmatpush.msra.mxu0 0.0
    %917 = vmatpush.msra.mxu0 0.0
    %918 = vmatpush.msra.mxu0 0.0
    %919 = vmatpush.msra.mxu0 0.0
    %920 = vmatpush.msra.mxu0 0.0
    %921 = vmatpush.msra.mxu0 %v898
    %922 = vmatpush.msra.mxu0 %v897
    %923 = vmatmul.f32.gmra.mxu0 %v902
    %v924 = vpop.f32.mrf.mxu0
    %v925 = vadd.f32 0.0, %v924
    %926 = vmatmul.f32.gmra.mxu0 %v905
    %v927 = vpop.f32.mrf.mxu0
    %v928 = vadd.f32 0.0, %v927
    %929 = vdwg.mxu0
    %v930 = vadd.f32 %v30, %v925
    %v931 = vadd.f32 %v31, %v928
    %v932 = vld [vmem:[%s7] sm:$0xff]
    %v933 = vld [vmem:[%s7 + $0x8] sm:$0xff]
    %935 = vset.pattern.permute.xlu0 0
    %936 = vperm.xlu0 %935, %v932
    %v937 = vpop.permute.xlu0 %936
    %940 = vset.pattern.permute.xlu0 0
    %941 = vperm.xlu0 %940, %v933
    %v942 = vpop.permute.xlu0 %941
    %v944 = vadd.f32 %v930, %v937
    %v945 = vadd.f32 %v931, %v942
    %946 = vst.msk [vmem:[#allocation4] sm:$0xff] %vm258, %v944
    %947 = vst.msk [vmem:[#allocation4 + $0x8] sm:$0xff] %vm258, %v945
    // Predicated region
    $region34: #{tpu_custom_call.1} parent=1 // pred_check
      _
    $region35: #{tpu_custom_call.1} parent=1 // pred_check_branch
      %949 = sbr.rel (0) target = $region37
    $region36: #{tpu_custom_call.1} parent=1 // pred_region
      %951 = vsyncadd [#allocation5], 0
      %s952 = sshll.u32 [#allocation4], 4
      %s953 = int_to_ptr.vmem [resolvable:$true] %s952
      %s954 = sshll.u32 %s8, 4
      %s955 = int_to_ptr.hbm [resolvable:$true] %s954
      %960 = dma.vmem_to_hbm [thread:$0]  %s953, 256, %s955, [#allocation5], 128, 128, 8
    $region37: #{tpu_custom_call.1} parent=1 // pred_fallthru
      _
    // Predicated region
    $region38: #{tpu_custom_call.1} parent=1 // pred_check
      _
    $region39: #{tpu_custom_call.1} parent=1 // pred_check_branch
      %962 = sbr.rel (0) target = $region41
    $region40: #{tpu_custom_call.1} parent=1 // pred_region
      %964 = dma.done [#allocation5], 256
    $region41: #{tpu_custom_call.1} parent=1 // pred_fallthru
      _
    %965 = vsyncpa [#allocation5], 1

</llo_original>
